<compile_context>
chip_gen: v7x
topology: tpu7x:2x2x1
jax: 0.10.0
libtpu: 0.0.40
codegen_flags: <defaults>
</compile_context>

<pallas_src>
import functools

import jax
import jax.numpy as jnp
from jax.experimental import pallas as pl
from jax.experimental.pallas import tpu as pltpu


def _rope_kernel(params_ref, cos_ref, sin_ref, *, pack, half):
    # params_ref: (2, pack*half) VMEM; row 0 = inv_freq tiled per sub-position,
    #             row 1 = integer sub-position offsets (0..pack-1 per group).
    # cos_ref / sin_ref: (tile, pack*dim) output blocks, dim == 2*half.
    tile = cos_ref.shape[0]
    row = jax.lax.broadcasted_iota(jnp.int32, (tile, 1), 0)
    base = ((row + tile * pl.program_id(0)) * pack).astype(jnp.float32)  # (tile, 1)
    t = base + params_ref[1:2, :]          # (tile, pack*half) exact integer positions
    freqs = t * params_ref[0:1, :]         # single f32 multiply == reference t*inv
    c = jnp.cos(freqs)                     # half-width transcendentals only
    s = jnp.sin(freqs)
    if pack == 1:
        # emb = [freqs, freqs]: two direct half-width stores, no concat temp.
        cos_ref[:, :half] = c
        cos_ref[:, half:] = c
        sin_ref[:, :half] = s
        sin_ref[:, half:] = s
    else:
        # Lane-dense packed layout: row = [emb(p0) | emb(p1) | ...] with
        # emb(p) = [freqs(p), freqs(p)]; build the 128-lane row and store densely.
        cp, sp = [], []
        for g in range(pack):
            cg = c[:, g * half:(g + 1) * half]
            sg = s[:, g * half:(g + 1) * half]
            cp += [cg, cg]
            sp += [sg, sg]
        cos_ref[...] = jnp.concatenate(cp, axis=-1)
        sin_ref[...] = jnp.concatenate(sp, axis=-1)


def _round_up8(n):
    return -(-n // 8) * 8


def _is_multi_tensorcore():
    # Only v7x-class chips expose 2 TensorCores per chip among the targets.
    try:
        kind = jax.devices()[0].device_kind.lower()
    except Exception:
        return False
    return "v7" in kind


def _pick_tile(rows, lane, two_cores):
    """Rows per grid step for a (rows, lane) f32 output pair.

    VMEM budget: 2 outputs x 2 pipeline buffers x tile x lane x 4 B <= ~8 MiB,
    well under the scoped default on v5e/v6e/v7x (no vmem_limit override needed).
    """
    bytes_per_row = 2 * 2 * lane * 4
    cap = max(8, min(4096, ((8 << 20) // bytes_per_row) // 8 * 8))
    if rows <= 8:
        return rows                       # single tiny block (== full array dim)
    if not two_cores:
        # 1 TC: the grid is a serial loop -> one block if it fits the budget.
        return rows if rows <= cap else cap
    # v7x: even (>=2) step count so both TensorCores get balanced work.
    steps = 2 * (-(-rows // (2 * cap)))
    return min(cap, _round_up8(-(-rows // steps)))


@functools.partial(jax.jit, static_argnames=("seq_len", "dim"))
def _rope_tables(inv_freq, seq_len, dim):
    half = dim // 2

    # Lane-dense packing: fold `pack` consecutive positions into one stored row
    # so stores are full 128-lane vregs; the wrapper reshape back is contiguous.
    pack = 1
    if dim < 128 and 128 % dim == 0 and seq_len % (128 // dim) == 0:
        pack = 128 // dim
    rows = seq_len // pack
    lane = pack * dim

    tile = _pick_tile(rows, lane, _is_multi_tensorcore())
    grid = (pl.cdiv(rows, tile),)

    # Per-column parameters (tiny, built host-side): inv_freq per column and the
    # integer sub-position offset of each packed group.
    sub = jnp.repeat(jnp.arange(pack, dtype=jnp.float32), half)      # (pack*half,)
    inv_tiled = jnp.tile(inv_freq.astype(jnp.float32), pack)         # (pack*half,)
    params = jnp.stack([inv_tiled, sub], axis=0)                     # (2, pack*half)

    kernel = functools.partial(_rope_kernel, pack=pack, half=half)
    cos2d, sin2d = pl.pallas_call(
        kernel,
        out_shape=(
            jax.ShapeDtypeStruct((rows, lane), jnp.float32),
            jax.ShapeDtypeStruct((rows, lane), jnp.float32),
        ),
        grid_spec=pltpu.PrefetchScalarGridSpec(
            num_scalar_prefetch=0,
            grid=grid,
            in_specs=[pl.BlockSpec((2, pack * half), lambda i: (0, 0))],
            out_specs=[
                pl.BlockSpec((tile, lane), lambda i: (i, 0)),
                pl.BlockSpec((tile, lane), lambda i: (i, 0)),
            ],
        ),
        compiler_params=pltpu.CompilerParams(
            dimension_semantics=("parallel",)
        ),
    )(params)

    # Contiguous (free) reshapes back to the module's cached layout.
    cos = cos2d.reshape(seq_len, 1, 1, dim)
    sin = sin2d.reshape(seq_len, 1, 1, dim)
    return cos, sin
    # TODO(synk): emitting only the unique half-columns and/or bf16 tables would
    # halve/quarter HBM writeback but changes the module's output contract.


class RotaryPositionalEmbedding:
    """JAX/Pallas port of fairseq RotaryPositionalEmbedding."""

    def __init__(self, dim, base=10000, precision=jnp.float16):
        self.dim = dim
        # inv_freq = 1 / base ** (arange(0, dim, 2) / dim)   (float32 buffer)
        self.inv_freq = 1.0 / (
            base ** (jnp.arange(0, dim, 2, dtype=jnp.float32) / dim)
        )
        self.precision = precision  # kept for parity; not applied (matches reference)
        self.seq_len_cached = None
        self.cos_cached = None
        self.sin_cached = None

    def __call__(self, x, seq_len=None):
        # x: T x B x C; the reference only uses x for device/dtype.
        if seq_len is None:
            seq_len = x.shape[0]
        if seq_len != self.seq_len_cached:
            self.seq_len_cached = seq_len
            self.cos_cached, self.sin_cached = _rope_tables(
                self.inv_freq, int(seq_len), self.dim
            )
        return self.cos_cached, self.sin_cached


def _reference(inv_freq, seq_len, dim):
    t = jnp.arange(seq_len, dtype=jnp.float32)
    freqs = jnp.einsum("i,j->ij", t, inv_freq)
    emb = jnp.concatenate([freqs, freqs], axis=-1)
    return (jnp.cos(emb)[:, None, None, :], jnp.sin(emb)[:, None, None, :])


if __name__ == "__main__":
    key = jax.random.PRNGKey(0)

    def check(seq_len, batch, dim, pass_seq_len=True):
        rope = RotaryPositionalEmbedding(dim)
        x = jax.random.normal(key, (seq_len, batch, dim), dtype=jnp.float32)
        if pass_seq_len:
            cos, sin = rope(x, seq_len=seq_len)
        else:
            cos, sin = rope(x)  # seq_len derived from x.shape[0]
        cos = jax.block_until_ready(cos)
        sin = jax.block_until_ready(sin)
        ref_cos, ref_sin = _reference(rope.inv_freq, seq_len, dim)
        assert cos.shape == (seq_len, 1, 1, dim)
        assert sin.shape == (seq_len, 1, 1, dim)
        assert jnp.allclose(cos, ref_cos, atol=1e-5, rtol=1e-5)
        assert jnp.allclose(sin, ref_sin, atol=1e-5, rtol=1e-5)

    check(8, 2, 32)                        # pack=4: tiny lane-dense single block
    check(300, 2, 64)                      # pack=2: packed lane-dense path
    check(255, 2, 64, pass_seq_len=False)  # odd seq -> pack=1 fallback, seq from x
    check(64, 2, 128)                      # dim>=128: pack=1, direct half stores
    print("KERNEL_OK")
</pallas_src>

<mosaic_0001>
module attributes {stable_mosaic.version = 11 : i64} {
  func.func @_rope_kernel(%arg0: i32, %arg1: memref<2x64xf32, #tpu.memory_space<vmem>>, %arg2: memref<2x128xf32, #tpu.memory_space<vmem>>, %arg3: memref<2x128xf32, #tpu.memory_space<vmem>>) attributes {dimension_semantics = [#tpu.dimension_semantics<parallel>], iteration_bounds = array<i64: 1>, scalar_prefetch = 0 : i64, scratch_operands = 0 : i64, tpu.core_type = #tpu.core_type<tc>, window_params = [{pipeline_mode = #tpu.pipeline_mode<synchronous>, transform_indices = @transform_0, window_bounds = array<i64: 2, 64>}, {transform_indices = @transform_1, window_bounds = array<i64: 2, 128>}, {transform_indices = @transform_2, window_bounds = array<i64: 2, 128>}]} {
    %0 = tpu.iota {dimensions = array<i32: 0>} : vector<2x1xi32>
    %c2_i32 = arith.constant 2 : i32
    %1 = arith.muli %c2_i32, %arg0 : i32
    %2 = vector.broadcast %1 : i32 to vector<2x1xi32>
    %3 = arith.addi %0, %2 : vector<2x1xi32>
    %c4_i32 = arith.constant 4 : i32
    %4 = vector.broadcast %c4_i32 : i32 to vector<2x1xi32>
    %5 = arith.muli %3, %4 : vector<2x1xi32>
    %6 = arith.sitofp %5 : vector<2x1xi32> to vector<2x1xf32>
    %c1 = arith.constant 1 : index
    %c0 = arith.constant 0 : index
    %7 = vector.load %arg1[%c1, %c0] : memref<2x64xf32, #tpu.memory_space<vmem>>, vector<1x64xf32>
    %8 = vector.broadcast %6 : vector<2x1xf32> to vector<2x64xf32>
    %9 = vector.broadcast %7 : vector<1x64xf32> to vector<2x64xf32>
    %10 = arith.addf %8, %9 : vector<2x64xf32>
    %c0_0 = arith.constant 0 : index
    %c0_1 = arith.constant 0 : index
    %11 = vector.load %arg1[%c0_0, %c0_1] : memref<2x64xf32, #tpu.memory_space<vmem>>, vector<1x64xf32>
    %12 = vector.broadcast %11 : vector<1x64xf32> to vector<2x64xf32>
    %13 = arith.mulf %10, %12 : vector<2x64xf32>
    %14 = math.cos %13 : vector<2x64xf32>
    %15 = math.sin %13 : vector<2x64xf32>
    %16 = vector.extract_strided_slice %14 {offsets = [0, 0], sizes = [2, 16], strides = [1, 1]} : vector<2x64xf32> to vector<2x16xf32>
    %17 = vector.extract_strided_slice %15 {offsets = [0, 0], sizes = [2, 16], strides = [1, 1]} : vector<2x64xf32> to vector<2x16xf32>
    %18 = vector.extract_strided_slice %14 {offsets = [0, 16], sizes = [2, 16], strides = [1, 1]} : vector<2x64xf32> to vector<2x16xf32>
    %19 = vector.extract_strided_slice %15 {offsets = [0, 16], sizes = [2, 16], strides = [1, 1]} : vector<2x64xf32> to vector<2x16xf32>
    %20 = vector.extract_strided_slice %14 {offsets = [0, 32], sizes = [2, 16], strides = [1, 1]} : vector<2x64xf32> to vector<2x16xf32>
    %21 = vector.extract_strided_slice %15 {offsets = [0, 32], sizes = [2, 16], strides = [1, 1]} : vector<2x64xf32> to vector<2x16xf32>
    %22 = vector.extract_strided_slice %14 {offsets = [0, 48], sizes = [2, 16], strides = [1, 1]} : vector<2x64xf32> to vector<2x16xf32>
    %23 = vector.extract_strided_slice %15 {offsets = [0, 48], sizes = [2, 16], strides = [1, 1]} : vector<2x64xf32> to vector<2x16xf32>
    %24 = tpu.concatenate %16, %16, %18, %18, %20, %20, %22, %22 in 1 : vector<2x16xf32>, vector<2x16xf32>, vector<2x16xf32>, vector<2x16xf32>, vector<2x16xf32>, vector<2x16xf32>, vector<2x16xf32>, vector<2x16xf32> -> vector<2x128xf32>
    %c0_2 = arith.constant 0 : index
    %c0_3 = arith.constant 0 : index
    %25 = vector.load %arg2[%c0_2, %c0_3] : memref<2x128xf32, #tpu.memory_space<vmem>>, vector<2x128xf32>
    tpu.vector_store %arg2[%c0_2, %c0_3], %24 {strides = array<i32>} : memref<2x128xf32, #tpu.memory_space<vmem>>, vector<2x128xf32>,
    %26 = tpu.concatenate %17, %17, %19, %19, %21, %21, %23, %23 in 1 : vector<2x16xf32>, vector<2x16xf32>, vector<2x16xf32>, vector<2x16xf32>, vector<2x16xf32>, vector<2x16xf32>, vector<2x16xf32>, vector<2x16xf32> -> vector<2x128xf32>
    %c0_4 = arith.constant 0 : index
    %c0_5 = arith.constant 0 : index
    %27 = vector.load %arg3[%c0_4, %c0_5] : memref<2x128xf32, #tpu.memory_space<vmem>>, vector<2x128xf32>
    tpu.vector_store %arg3[%c0_4, %c0_5], %26 {strides = array<i32>} : memref<2x128xf32, #tpu.memory_space<vmem>>, vector<2x128xf32>,
    return
  }
  func.func @transform_0(%arg0: i32) -> (i32, i32) {
    %c0_i32 = arith.constant 0 : i32
    %c0_i32_0 = arith.constant 0 : i32
    %c0_i32_1 = arith.constant 0 : i32
    return %c0_i32, %c0_i32_0 : i32, i32
  }
  func.func @transform_1(%arg0: i32) -> (i32, i32) {
    %c0_i32 = arith.constant 0 : i32
    %c0_i32_0 = arith.constant 0 : i32
    return %arg0, %c0_i32 : i32, i32
  }
  func.func @transform_2(%arg0: i32) -> (i32, i32) {
    %c0_i32 = arith.constant 0 : i32
    %c0_i32_0 = arith.constant 0 : i32
    return %arg0, %c0_i32 : i32, i32
  }
}

</mosaic_0001>

<llo_original>
// kernel: tile.8
$region0: #{tile.8}
  #allocation2 [shape = 's32[1]{0}', space=sflag, size = 0x4, scoped, tag = 'scoped memory for tile.8']
  %s0 = inlined_call_operand.hbm [shape: f32[16], index: 0, kind: input, shape index: {}]
  %s1 = inlined_call_operand.vmem [shape: f32[4,16], index: 1, kind: output, shape index: {}]
  $region1: #{tile.8} parent=0
    #allocation0 [shape = 'u8[512]{0}', space=vmem, size = 0x400, scoped, tag = 'operand span for operand 0']
    #allocation1 [shape = 's32[1]{0}', space=sflag, size = 0x4, scoped, tag = 'scoped memory for tile.8']
    %2 = vsyncpa [#allocation1], 0
    // Predicated region
    $region2: #{tile.8} parent=1 // pred_check
      _
    $region3: #{tile.8} parent=1 // pred_check_branch
      %4 = sbr.rel (0) target = $region5
    $region4: #{tile.8} parent=1 // pred_region
      %s6 = ssub.s32 16, 16
      %7 = vsyncadd [#allocation1], %s6
      %s9 = sshll.u32 [#allocation0], 4
      %s10 = int_to_ptr.vmem [resolvable:$true] %s9
      %12 = dma.hbm_to_vmem [thread:$0]  %s0, 16, %s10, [#allocation1]
    $region5: #{tile.8} parent=1 // pred_fallthru
      _
    // Predicated region
    $region6: #{tile.8} parent=1 // pred_check
      _
    $region7: #{tile.8} parent=1 // pred_check_branch
      %14 = sbr.rel (0) target = $region9
    $region8: #{tile.8} parent=1 // pred_region
      %15 = dma.done [#allocation1], 16
    $region9: #{tile.8} parent=1 // pred_fallthru
      _
    %v16 = vld [vmem:[#allocation0] ss:$0 sm:$0xff]
    %17 = vst [vmem:[%s1] sm:$0xf] %v16
    %18 = vsyncpa [#allocation1], 1

// kernel: tile.9
$region0: #{tile.9}
  %s0 = inlined_call_operand.vmem [shape: f32[4,16], index: 0, kind: input, shape index: {}]
  %s1 = inlined_call_operand.vmem [shape: f32[1,64], index: 1, kind: output, shape index: {}]
  $region1: #{tile.9} parent=0
    #allocation0 [shape = 'u8[4096]{0}', space=vmem, size = 0x1000, scoped, tag = 'scoped mem for output reshape']
    #allocation1 [shape = 'u8[4096]{0}', space=vmem, size = 0x1000, scoped, tag = 'scoped mem for input reshape']
    %s3 = sshllo.u32 0, 4
    %v4 = vld [vmem:[%s0] sm:%s3]
    %5 = vst [vmem:[#allocation1] sm:%s3] %v4
    %v6 = vld [vmem:[#allocation1] sm:$0x1]
    %vm7 = vcmask 130048
    %8 = vst.msk [vmem:[#allocation0] sm:$0x1] %vm7, %v6
    %s9 = scalar_lea.vmem [#allocation1], 3
    %v10 = vld [vmem:[%s9] sm:$0x1]
    %11 = vrot.lane.b32.xlu0 %v10, 48
    %v12 = vpop.permute.xlu0 %11
    %vm13 = vcmask 523648
    %14 = vst.msk [vmem:[#allocation0] sm:$0x1] %vm13, %v12
    %s15 = scalar_lea.vmem [#allocation1], 2
    %v16 = vld [vmem:[%s15] sm:$0x1]
    %17 = vrot.lane.b32.xlu0 %v16, 32
    %v18 = vpop.permute.xlu0 %17
    %vm19 = vcmask 392448
    %20 = vst.msk [vmem:[#allocation0] sm:$0x1] %vm19, %v18
    %s21 = scalar_lea.vmem [#allocation1], 1
    %v22 = vld [vmem:[%s21] sm:$0x1]
    %23 = vrot.lane.b32.xlu0 %v22, 16
    %v24 = vpop.permute.xlu0 %23
    %vm25 = vcmask 261248
    %26 = vst.msk [vmem:[#allocation0] sm:$0x1] %vm25, %v24
    %s28 = sshllo.u32 0, 1
    %v30 = vld [vmem:[#allocation0] sm:%s28]
    %s31 = sshllo.u32 0, 1
    %32 = vst [vmem:[%s1] sm:%s31] %v30

// kernel: _rope_tables.1
$region0: #{_rope_tables.1}
  #allocation0 [shape = 'u32[]', space=smem, size = 0x4, offset = 0x4, fixed_abs, tag = 'smem constant byte address 0x4 - core index']
  #allocation1 [shape = 'u32[144,128]{1,0:T(1,128)}', space=vmem, size = 0x12000, scoped, tag = 'internal scratch']
  %s0 = inlined_call_operand.vmem [shape: f32[2,64], index: 0, kind: input, shape index: {}]
  %s1 = inlined_call_operand.vmem [shape: f32[2,128], index: 1, kind: output, shape index: {0}]
  %s2 = inlined_call_operand.vmem [shape: f32[2,128], index: 2, kind: output, shape index: {1}]
  %3 = xla_tuple %s1, %s2
  %s4 = sld [smem:[#allocation0]]
  $region22: #{_rope_tables.1} parent=0
    _
  %s6 = ssub.s32 1, %s4
  %s7 = scalar_select 0, %s6, %s4
  // Predicated region
  $region2: #{_rope_tables.1} parent=0 // pred_check
    _
  $region3: #{_rope_tables.1} parent=0 // pred_check_branch
    %9 = sbr.rel (0) target = $region5
  $region4: #{_rope_tables.1} parent=0 // pred_region
    _
  $region5: #{_rope_tables.1} parent=0 // pred_fallthru
    _
  %v10 = vlaneseq
  %v11 = vshrl.u32 %v10, 7
  %s12 = smul.u32 0, 2
  %v13 = vstv %s12
  %v14 = vadd.s32 %v11, %v13
  %v15 = vmul.u32 %v14, 4
  %v16 = vcvt.s32.f32 %v15
  %v17 = vld [vmem:[%s0 + $0x1] sm:$0x1]
  %v18 = vlaneseq
  %v19 = vshrl.u32 %v18, 7
  %v20 = vsub.s32 0, %v19
  %v21 = vrot.slane %v17, %v20
  %v22 = vadd.f32 %v16, %v21
  %v23 = vld [vmem:[%s0] sm:$0x1]
  %v24 = vlaneseq
  %v25 = vshrl.u32 %v24, 7
  %v26 = vsub.s32 0, %v25
  %v27 = vrot.slane %v23, %v26
  %v28 = vmul.f32 %v22, %v27
  %v29 = vand.u32 2147483647, %v28
  %vm30 = vcmp.le.f32.partialorder %v29, 0.7853982
  %vm31 = vcmp.lt.s32.totalorder %v28, 0
  %v32 = vand.u32 %v28, 2139095040
  %v33 = vshrl.u32 %v32, 23
  %v34 = vsub.s32 %v33, 127
  %v35 = vand.u32 2147483647, %v28
  %v36 = vand.u32 %v35, 8388607
  %v37 = vor.u32 %v36, 8388608
  %v38 = vsub.s32 0, %v37
  %v39 = vadd.s32 %v34, 1
  %vm40 = vcmp.gt.s32.totalorder %v39, 0
  %v41 = vsel %vm40, %v39, 0
  %v42 = vshrl.u32 %v41, 5
  %v43 = vand.u32 %v41, 31
  %v44 = vsub.s32 32, %v43
  %v45 = vshrl.u32 683565275, %v44
  %v46 = vshll.u32 683565275, %v43
  %v47 = vshrl.u32 2475754826, %v44
  %v48 = vor.u32 %v46, %v47
  %v49 = vshll.u32 2475754826, %v43
  %v50 = vshrl.u32 2131351028, %v44
  %v51 = vor.u32 %v49, %v50
  %v52 = vshll.u32 2131351028, %v43
  %v53 = vshrl.u32 2102212464, %v44
  %v54 = vor.u32 %v52, %v53
  %v55 = vshll.u32 2102212464, %v43
  %v56 = vshrl.u32 920167782, %v44
  %v57 = vor.u32 %v55, %v56
  %v58 = vshll.u32 920167782, %v43
  %v59 = vshrl.u32 1326507024, %v44
  %v60 = vor.u32 %v58, %v59
  %vm61 = vcmp.lt.s32.totalorder %v42, 1
  %vm62 = vcmp.lt.s32.totalorder %v42, 2
  %vm63 = vcmp.lt.s32.totalorder %v42, 3
  %vm64 = vcmp.lt.s32.totalorder %v42, 4
  %v65 = vsel %vm61, %v45, %v48
  %v66 = vsel %vm64, %v54, 2102212464
  %v67 = vsel %vm63, %v51, %v66
  %v68 = vsel %vm62, %v65, %v67
  %v69 = vsel %vm61, %v48, %v51
  %v70 = vsel %vm64, %v57, 920167782
  %v71 = vsel %vm63, %v54, %v70
  %v72 = vsel %vm62, %v69, %v71
  %v73 = vsel %vm61, %v51, %v54
  %v74 = vsel %vm64, %v60, 1326507024
  %v75 = vsel %vm63, %v57, %v74
  %v76 = vsel %vm62, %v73, %v75
  %v77 = vshll.u32 %v37, 8
  %v78 = vmul.u32.u64.compose %v77, %v76
  %v79 = vextract.low.u32 %v78
  %v80 = vextract.high.u32 %v78
  %v81 = vmul.u32.u64.compose %v77, %v72
  %v82 = vextract.low.u32 %v81
  %v83 = vextract.high.u32 %v81
  %v84 = vmul.u32 %v77, %v68
  %v85 = vadd.s32 %v80, %v82
  %vm86 = vc.u32 %v80, %v82
  %v87 = vadd.s32 %v83, 1
  %v88 = vsel %vm86, %v87, %v83
  %v89 = vadd.s32 %v84, %v88
  %v90 = vadd.s32 %v89, 536870912
  %v91 = vshrl.u32 %v90, 30
  %v92 = vshll.u32 %v91, 30
  %v93 = vsub.s32 %v89, %v92
  %vm94 = vcmp.lt.s32.totalorder %v93, 0
  %v95 = vsub.s32 0, %v93
  %v96 = vsel %vm94, %v95, %v93
  %v97 = vclz %v96
  %v98 = vsub.s32 %v97, 2
  %vm99 = vcmp.gt.s32.totalorder 0, %v98
  %v100 = vsel %vm99, 0, %v98
  %v101 = vsub.s32 32, %v100
  %v102 = vshll.u32 %v93, %v100
  %v103 = vshrl.u32 %v85, %v101
  %v104 = vor.u32 %v102, %v103
  %v105 = vsub.s32 4294967266, %v100
  %v106 = vadd.s32 %v105, 127
  %v107 = vshll.u32 %v106, 23
  %v108 = vor.u32 4788187, %v107
  %v109 = vand.u32 2147483647, %v108
  %v111 = vcvt.s32.f32 %v104
  %v112 = vmul.f32 %v111, %v109
  %v113 = vxor.u32 %v112, 2147483648
  %v114 = vsel %vm31, %v113, %v112
  %v115 = vsub.s32 4, %v91
  %v116 = vsel %vm31, %v115, %v91
  %v117 = vsel %vm30, %v28, %v114
  %v118 = vsel %vm30, 0, %v116
  %v119 = vcosq.f32.pop %v117
  %v120 = vsinq.f32.pop %v117
  %vm121 = vweird.f32 %v28
  %v122 = vand.u32 %v118, 3
  %vm123 = vcmp.lt.s32.totalorder %v122, 2
  %vm124 = vcmp.eq.s32.totalorder %v122, 0
  %v125 = vxor.u32 %v120, 2147483648
  %v126 = vsel %vm124, %v119, %v125
  %vm127 = vcmp.eq.s32.totalorder %v122, 2
  %v128 = vxor.u32 %v119, 2147483648
  %v129 = vsel %vm127, %v128, %v120
  %v130 = vsel %vm123, %v126, %v129
  %v131 = vsel %vm121, nan, %v130
  %v132 = vand.u32 2147483647, %v28
  %vm133 = vcmp.le.f32.partialorder %v132, 0.7853982
  %vm134 = vcmp.lt.s32.totalorder %v28, 0
  %v135 = vand.u32 %v28, 2139095040
  %v136 = vshrl.u32 %v135, 23
  %v137 = vsub.s32 %v136, 127
  %v138 = vand.u32 2147483647, %v28
  %v139 = vand.u32 %v138, 8388607
  %v140 = vor.u32 %v139, 8388608
  %v141 = vsub.s32 0, %v140
  %v142 = vadd.s32 %v137, 1
  %vm143 = vcmp.gt.s32.totalorder %v142, 0
  %v144 = vsel %vm143, %v142, 0
  %v145 = vshrl.u32 %v144, 5
  %v146 = vand.u32 %v144, 31
  %v147 = vsub.s32 32, %v146
  %v148 = vshrl.u32 683565275, %v147
  %v149 = vshll.u32 683565275, %v146
  %v150 = vshrl.u32 2475754826, %v147
  %v151 = vor.u32 %v149, %v150
  %v152 = vshll.u32 2475754826, %v146
  %v153 = vshrl.u32 2131351028, %v147
  %v154 = vor.u32 %v152, %v153
  %v155 = vshll.u32 2131351028, %v146
  %v156 = vshrl.u32 2102212464, %v147
  %v157 = vor.u32 %v155, %v156
  %v158 = vshll.u32 2102212464, %v146
  %v159 = vshrl.u32 920167782, %v147
  %v160 = vor.u32 %v158, %v159
  %v161 = vshll.u32 920167782, %v146
  %v162 = vshrl.u32 1326507024, %v147
  %v163 = vor.u32 %v161, %v162
  %vm164 = vcmp.lt.s32.totalorder %v145, 1
  %vm165 = vcmp.lt.s32.totalorder %v145, 2
  %vm166 = vcmp.lt.s32.totalorder %v145, 3
  %vm167 = vcmp.lt.s32.totalorder %v145, 4
  %v168 = vsel %vm164, %v148, %v151
  %v169 = vsel %vm167, %v157, 2102212464
  %v170 = vsel %vm166, %v154, %v169
  %v171 = vsel %vm165, %v168, %v170
  %v172 = vsel %vm164, %v151, %v154
  %v173 = vsel %vm167, %v160, 920167782
  %v174 = vsel %vm166, %v157, %v173
  %v175 = vsel %vm165, %v172, %v174
  %v176 = vsel %vm164, %v154, %v157
  %v177 = vsel %vm167, %v163, 1326507024
  %v178 = vsel %vm166, %v160, %v177
  %v179 = vsel %vm165, %v176, %v178
  %v180 = vshll.u32 %v140, 8
  %v181 = vmul.u32.u64.compose %v180, %v179
  %v182 = vextract.low.u32 %v181
  %v183 = vextract.high.u32 %v181
  %v184 = vmul.u32.u64.compose %v180, %v175
  %v185 = vextract.low.u32 %v184
  %v186 = vextract.high.u32 %v184
  %v187 = vmul.u32 %v180, %v171
  %v188 = vadd.s32 %v183, %v185
  %vm189 = vc.u32 %v183, %v185
  %v190 = vadd.s32 %v186, 1
  %v191 = vsel %vm189, %v190, %v186
  %v192 = vadd.s32 %v187, %v191
  %v193 = vadd.s32 %v192, 536870912
  %v194 = vshrl.u32 %v193, 30
  %v195 = vshll.u32 %v194, 30
  %v196 = vsub.s32 %v192, %v195
  %vm197 = vcmp.lt.s32.totalorder %v196, 0
  %v198 = vsub.s32 0, %v196
  %v199 = vsel %vm197, %v198, %v196
  %v200 = vclz %v199
  %v201 = vsub.s32 %v200, 2
  %vm202 = vcmp.gt.s32.totalorder 0, %v201
  %v203 = vsel %vm202, 0, %v201
  %v204 = vsub.s32 32, %v203
  %v205 = vshll.u32 %v196, %v203
  %v206 = vshrl.u32 %v188, %v204
  %v207 = vor.u32 %v205, %v206
  %v208 = vsub.s32 4294967266, %v203
  %v209 = vadd.s32 %v208, 127
  %v210 = vshll.u32 %v209, 23
  %v211 = vor.u32 4788187, %v210
  %v212 = vand.u32 2147483647, %v211
  %v214 = vcvt.s32.f32 %v207
  %v215 = vmul.f32 %v214, %v212
  %v216 = vxor.u32 %v215, 2147483648
  %v217 = vsel %vm134, %v216, %v215
  %v218 = vsub.s32 4, %v194
  %v219 = vsel %vm134, %v218, %v194
  %v220 = vsel %vm133, %v28, %v217
  %v221 = vsel %vm133, 0, %v219
  %v222 = vcosq.f32.pop %v220
  %v223 = vsinq.f32.pop %v220
  %vm224 = vweird.f32 %v28
  %v225 = vadd.s32 %v221, 3
  %v226 = vand.u32 %v225, 3
  %vm227 = vcmp.lt.s32.totalorder %v226, 2
  %vm228 = vcmp.eq.s32.totalorder %v226, 0
  %v229 = vxor.u32 %v223, 2147483648
  %v230 = vsel %vm228, %v222, %v229
  %vm231 = vcmp.eq.s32.totalorder %v226, 2
  %v232 = vxor.u32 %v222, 2147483648
  %v233 = vsel %vm231, %v232, %v223
  %v234 = vsel %vm227, %v230, %v233
  %v235 = vsel %vm224, nan, %v234
  %237 = vrot.lane.b32.xlu0 %v131, 16
  %v238 = vpop.permute.xlu0 %237
  %240 = vrot.lane.b32.xlu0 %v131, 32
  %v241 = vpop.permute.xlu0 %240
  %243 = vrot.lane.b32.xlu0 %v131, 48
  %v244 = vpop.permute.xlu0 %243
  %246 = vrot.lane.b32.xlu0 %v131, 64
  %v247 = vpop.permute.xlu0 %246
  %vm249 = vcmask 130048
  %v250 = vsel %vm249, %v131, %v238
  %vm251 = vcmask 261120
  %v252 = vsel %vm251, %v250, %v238
  %vm253 = vcmask 392192
  %v254 = vsel %vm253, %v252, %v241
  %vm255 = vcmask 523264
  %v256 = vsel %vm255, %v254, %v241
  %vm257 = vcmask 654336
  %v258 = vsel %vm257, %v256, %v244
  %vm259 = vcmask 785408
  %v260 = vsel %vm259, %v258, %v244
  %vm261 = vcmask 916480
  %v262 = vsel %vm261, %v260, %v247
  %263 = vst [vmem:[%s1] sm:$0x3] %v262
  %265 = vrot.lane.b32.xlu0 %v235, 16
  %v266 = vpop.permute.xlu0 %265
  %268 = vrot.lane.b32.xlu0 %v235, 32
  %v269 = vpop.permute.xlu0 %268
  %271 = vrot.lane.b32.xlu0 %v235, 48
  %v272 = vpop.permute.xlu0 %271
  %274 = vrot.lane.b32.xlu0 %v235, 64
  %v275 = vpop.permute.xlu0 %274
  %v277 = vsel %vm249, %v235, %v266
  %v278 = vsel %vm251, %v277, %v266
  %v279 = vsel %vm253, %v278, %v269
  %v280 = vsel %vm255, %v279, %v269
  %v281 = vsel %vm257, %v280, %v272
  %v282 = vsel %vm259, %v281, %v272
  %v283 = vsel %vm261, %v282, %v275
  %284 = vst [vmem:[%s2] sm:$0x3] %v283
  // Predicated region
  $region6: #{_rope_tables.1} parent=0 // pred_check
    _
  $region7: #{_rope_tables.1} parent=0 // pred_check_branch
    %286 = sbr.rel (0) target = $region9
  $region8: #{_rope_tables.1} parent=0 // pred_region
    _
  $region9: #{_rope_tables.1} parent=0 // pred_fallthru
    _
  // Predicated region
  $region10: #{_rope_tables.1} parent=0 // pred_check
    _
  $region11: #{_rope_tables.1} parent=0 // pred_check_branch
    %288 = sbr.rel (0) target = $region13
  $region12: #{_rope_tables.1} parent=0 // pred_region
    _
  $region13: #{_rope_tables.1} parent=0 // pred_fallthru
    _
  // Predicated region
  $region14: #{_rope_tables.1} parent=0 // pred_check
    _
  $region15: #{_rope_tables.1} parent=0 // pred_check_branch
    %290 = sbr.rel (0) target = $region17
  $region16: #{_rope_tables.1} parent=0 // pred_region
    _
  $region17: #{_rope_tables.1} parent=0 // pred_fallthru
    _
  // Predicated region
  $region18: #{_rope_tables.1} parent=0 // pred_check
    _
  $region19: #{_rope_tables.1} parent=0 // pred_check_branch
    %292 = sbr.rel (0) target = $region21
  $region20: #{_rope_tables.1} parent=0 // pred_region
    _
  $region21: #{_rope_tables.1} parent=0 // pred_fallthru
    _

</llo_original>
